<compile_context>
chip_gen: v6e
topology: v6e:2x2x1
jax: 0.10.0
libtpu: 0.0.40
codegen_flags: <defaults>
</compile_context>

<pallas_src>
import functools

import jax
import jax.numpy as jnp
from jax.experimental import pallas as pl
from jax.experimental.pallas import tpu as pltpu


def _round_up(x, m):
    return (x + m - 1) // m * m


def _brain_kernel(x_ref, w_ref, b_ref, wq_ref, newx_ref, q_ref, *, qk):
    """One batch tile; all lane dims are multiples of 128.

    x_ref   : (TB, K_pad)    f32/bf16  neuron state (perceptors written by env)
    w_ref   : (K_pad, OF_pad) bf16     dense-ified SparseLinear weights (in x out)
    b_ref   : (1, OF_pad)     f32      SparseLinear bias (zero in padded lanes)
    wq_ref  : (QK, OF_pad->NA_pad)     motor_to_q embedded in the last QK lanes
    newx_ref: (TB, OF_pad)    bf16     sigmoid(think_layer(x))  (padded lanes -> 0.5)
    q_ref   : (TB, NA_pad)    f32      Q-values (padded lanes -> 0)
    """
    # Cast activations to the MXU dtype in-kernel (VPU, hidden under the matmul).
    x = x_ref[...].astype(w_ref.dtype)
    # SparseLinear (as dense MXU matmul), f32 accumulation.
    h = jnp.dot(x, w_ref[...], preferred_element_type=jnp.float32)
    h = h + b_ref[...]                       # f32 bias add (VPU)
    new_x = jax.nn.sigmoid(h)                # f32 sigmoid (EUP) — keeps v5e happy
    newx_ref[...] = new_x.astype(newx_ref.dtype)   # bf16 store: halves HBM writes

    # motor_to_q: only the trailing QK (128-multiple) lanes of new_x can contain
    # motor neurons; the slice is static and lane-tile aligned (no XLU shuffle).
    of_pad = new_x.shape[1]
    motor_blk = new_x[:, of_pad - qk:]
    # Non-motor / padded lanes (sigmoid(0)=0.5) multiply exactly-zero wq rows.
    q_ref[...] = jnp.dot(motor_blk.astype(wq_ref.dtype), wq_ref[...],
                         preferred_element_type=jnp.float32)


def prepare_brain_params(w_dense_in_out, bias, wq_in_out, *, n_motors,
                         compute_dtype=jnp.bfloat16):
    """One-time (init-time) dense-ification padding of the model parameters.

    Returns ((w_p, b_p, wq_p), meta) with all lane dims padded to 128.
    Zero-padding is mathematically inert: padded K rows of W are zero, padded
    OF columns give sigmoid(0)=0.5 but hit exactly-zero wq rows, padded action
    columns of wq are zero so the extra q lanes are zero.
    """
    K, out_features = w_dense_in_out.shape
    n_actions = wq_in_out.shape[1]

    K_pad = _round_up(K, 128)
    OF_pad = _round_up(out_features, 128)
    NA_pad = _round_up(n_actions, 128)
    pad_of = OF_pad - out_features
    # Trailing lane-block window of new_x that covers the motor neurons (+ the
    # OF padding lanes).  Always a multiple of 128, <= OF_pad.
    QK = min(OF_pad, _round_up(n_motors + pad_of, 128))

    w_p = jnp.zeros((K_pad, OF_pad), compute_dtype).at[:K, :out_features].set(
        jnp.asarray(w_dense_in_out, compute_dtype))
    b_p = jnp.zeros((1, OF_pad), jnp.float32).at[:, :out_features].set(
        jnp.asarray(bias, jnp.float32).reshape(1, out_features))
    # wq rows index into the last QK lanes of new_x; motors sit at the tail of
    # the real out_features, i.e. at row0 .. row0+n_motors within this window.
    row0 = out_features - n_motors - (OF_pad - QK)
    wq_p = jnp.zeros((QK, NA_pad), compute_dtype).at[
        row0:row0 + n_motors, :n_actions].set(jnp.asarray(wq_in_out, compute_dtype))

    meta = dict(n_neurons=K, out_features=out_features, n_motors=n_motors,
                n_actions=n_actions, K_pad=K_pad, OF_pad=OF_pad,
                NA_pad=NA_pad, QK=QK)
    return (w_p, b_p, wq_p), meta


def _pick_batch_tile(B):
    """Batch tile: >=2 grid steps for v7x's two TCs, tiles capped at 512 rows,
    multiples of 16 sublanes (native bf16 tile for the new_x output)."""
    if B <= 32:
        return _round_up(max(B, 1), 16)
    n_tiles = max(2, pl.cdiv(B, 512))
    return _round_up(pl.cdiv(B, n_tiles), 16)


def brain_think(x, prepared_params, meta):
    """Returns (new_x, q) like BrainModel.think, computed in one Pallas kernel."""
    w_p, b_p, wq_p = prepared_params
    B, K = x.shape
    assert K == meta["n_neurons"]
    K_pad, OF_pad, NA_pad, QK = (meta["K_pad"], meta["OF_pad"],
                                 meta["NA_pad"], meta["QK"])

    TB = _pick_batch_tile(B)
    B_pad = _round_up(B, TB)

    # Only pad x when it is actually misaligned (skip the extra XLA copy pass).
    if (B_pad, K_pad) != (B, K):
        x_p = jnp.zeros((B_pad, K_pad), x.dtype).at[:B, :K].set(x)
    else:
        x_p = x

    grid = (B_pad // TB,)

    # Explicit scoped-VMEM budget (double-buffered tiles + resident weights).
    est = (2 * TB * K_pad * jnp.dtype(x_p.dtype).itemsize   # x tiles
           + 2 * TB * OF_pad * 2                            # bf16 new_x tiles
           + 2 * TB * NA_pad * 4                            # f32 q tiles
           + 2 * K_pad * OF_pad * 2                         # bf16 W
           + 2 * OF_pad * 4                                 # f32 bias
           + 2 * QK * NA_pad * 2)                           # bf16 wq
    vmem_limit = int(min(48 << 20, max(16 << 20, 2 * est)))

    kernel = functools.partial(_brain_kernel, qk=QK)

    new_x_p, q_p = pl.pallas_call(
        kernel,
        out_shape=(
            jax.ShapeDtypeStruct((B_pad, OF_pad), jnp.bfloat16),
            jax.ShapeDtypeStruct((B_pad, NA_pad), jnp.float32),
        ),
        grid_spec=pltpu.PrefetchScalarGridSpec(
            num_scalar_prefetch=0,
            grid=grid,
            in_specs=[
                # Batch tile streams; weights/bias/wq have constant block index
                # so they are DMA'd once and stay VMEM-resident across tiles.
                pl.BlockSpec((TB, K_pad), lambda i: (i, 0)),
                pl.BlockSpec((K_pad, OF_pad), lambda i: (0, 0)),
                pl.BlockSpec((1, OF_pad), lambda i: (0, 0)),
                pl.BlockSpec((QK, NA_pad), lambda i: (0, 0)),
            ],
            out_specs=[
                pl.BlockSpec((TB, OF_pad), lambda i: (i, 0)),
                pl.BlockSpec((TB, NA_pad), lambda i: (i, 0)),
            ],
        ),
        compiler_params=pltpu.CompilerParams(
            # Batch tiles are independent -> shard across v7x's 2 TensorCores;
            # neutral on v5e/v6e.
            dimension_semantics=("parallel",),
            vmem_limit_bytes=vmem_limit,
        ),
    )(x_p, w_p, b_p, wq_p)

    return (new_x_p[:B, :meta["out_features"]],
            q_p[:B, :meta["n_actions"]])


def brain_forward(x, prepared_params, meta):
    """BrainModel.forward: only the Q-values."""
    _, q = brain_think(x, prepared_params, meta)
    return q


def make_params(key, n_neurons, n_perceptors, n_motors, n_connections, n_actions):
    """Deterministic synthetic parameters mirroring the module's __init__ shapes."""
    out_features = n_neurons - n_perceptors
    k_idx, k_w, k_b, k_q = jax.random.split(key, 4)

    # SparseLinear: each output neuron has `n_connections` incoming connections.
    index_tensor = jax.random.randint(
        k_idx, (out_features, n_connections), 0, n_neurons, dtype=jnp.int32)
    sparse_w = jax.random.uniform(
        k_w, (out_features, n_connections), jnp.float32, -0.5, 0.5)
    sparse_b = jax.random.uniform(k_b, (out_features,), jnp.float32, -0.1, 0.1)

    # Scatter sparse weights into the equivalent dense (n_neurons, out) matrix
    # (init-time glue; duplicate indices accumulate like gather-then-sum).
    rows = jnp.broadcast_to(
        jnp.arange(out_features, dtype=jnp.int32)[:, None],
        (out_features, n_connections))
    w_dense = jnp.zeros((out_features, n_neurons), jnp.float32)
    w_dense = w_dense.at[rows, index_tensor].add(sparse_w)
    w_dense_in_out = w_dense.T                      # (n_neurons, out_features)
    bias = sparse_b                                 # (out_features,)

    # motor_to_q: nn.Linear(n_motors, n_actions, bias=False), stored (in, out).
    wq = jax.random.uniform(
        k_q, (n_actions, n_motors), jnp.float32, -0.3, 0.3)
    wq_in_out = wq.T                                # (n_motors, n_actions)

    return w_dense_in_out, bias, wq_in_out


def reference_think(x, w_dense_in_out, bias, wq_in_out, *, n_motors,
                    compute_dtype=jnp.bfloat16):
    """Pure-JAX reference with the same dtype policy as the kernel."""
    h = jnp.dot(x.astype(compute_dtype), w_dense_in_out.astype(compute_dtype),
                preferred_element_type=jnp.float32) + bias.astype(jnp.float32)
    new_x = jax.nn.sigmoid(h)
    q = jnp.dot(new_x[:, -n_motors:].astype(compute_dtype),
                wq_in_out.astype(compute_dtype),
                preferred_element_type=jnp.float32)
    return new_x, q


if __name__ == "__main__":
    # Small shapes consistent with the module's forward; batch=256 gives two
    # 128-row tiles so the "parallel" grid axis actually spans 2 grid steps
    # (both v7x TensorCores) and the MXU M dimension is filled.
    n_neurons = 128
    n_perceptors = 32
    n_motors = 16
    n_connections = 8
    n_actions = 8
    batch = 256

    key = jax.random.PRNGKey(0)
    k_params, k_x = jax.random.split(key)

    w_dense_in_out, bias, wq_in_out = make_params(
        k_params, n_neurons, n_perceptors, n_motors, n_connections, n_actions)

    # One-time parameter preparation (dense-ify + pad), reused every forward.
    prepared, meta = prepare_brain_params(
        w_dense_in_out, bias, wq_in_out, n_motors=n_motors)

    x = jax.random.uniform(k_x, (batch, n_neurons), jnp.float32)

    new_x, q = brain_think(x, prepared, meta)
    new_x = jax.block_until_ready(new_x)
    q = jax.block_until_ready(q)

    q_only = jax.block_until_ready(brain_forward(x, prepared, meta))

    new_x_ref, q_ref = reference_think(
        x, w_dense_in_out, bias, wq_in_out, n_motors=n_motors)

    assert q.shape == (batch, n_actions)
    assert new_x.shape == (batch, n_neurons - n_perceptors)
    assert q_only.shape == (batch, n_actions)
    # new_x is emitted in bf16 now -> loosened tolerance vs the f32 reference.
    assert jnp.allclose(new_x.astype(jnp.float32), new_x_ref, atol=2e-2, rtol=2e-2)
    assert jnp.allclose(q, q_ref, atol=1e-2, rtol=1e-2)
    assert jnp.allclose(q_only, q, atol=0, rtol=0)

    print("KERNEL_OK")
</pallas_src>

<mosaic_0001>
module attributes {stable_mosaic.version = 11 : i64} {
  func.func @_brain_kernel(%arg0: i32, %arg1: memref<128x128xf32, #tpu.memory_space<vmem>>, %arg2: memref<128x128xbf16, #tpu.memory_space<vmem>>, %arg3: memref<1x128xf32, #tpu.memory_space<vmem>>, %arg4: memref<128x128xbf16, #tpu.memory_space<vmem>>, %arg5: memref<128x128xbf16, #tpu.memory_space<vmem>>, %arg6: memref<128x128xf32, #tpu.memory_space<vmem>>) attributes {dimension_semantics = [#tpu.dimension_semantics<parallel>], iteration_bounds = array<i64: 2>, scalar_prefetch = 0 : i64, scratch_operands = 0 : i64, tpu.core_type = #tpu.core_type<tc>, window_params = [{transform_indices = @transform_0, window_bounds = array<i64: 128, 128>}, {pipeline_mode = #tpu.pipeline_mode<synchronous>, transform_indices = @transform_1, window_bounds = array<i64: 128, 128>}, {pipeline_mode = #tpu.pipeline_mode<synchronous>, transform_indices = @transform_2, window_bounds = array<i64: 1, 128>}, {pipeline_mode = #tpu.pipeline_mode<synchronous>, transform_indices = @transform_3, window_bounds = array<i64: 128, 128>}, {transform_indices = @transform_4, window_bounds = array<i64: 128, 128>}, {transform_indices = @transform_5, window_bounds = array<i64: 128, 128>}]} {
    %c0 = arith.constant 0 : index
    %c0_0 = arith.constant 0 : index
    %0 = vector.load %arg1[%c0, %c0_0] : memref<128x128xf32, #tpu.memory_space<vmem>>, vector<128x128xf32>
    %1 = arith.truncf %0 : vector<128x128xf32> to vector<128x128xbf16>
    %c0_1 = arith.constant 0 : index
    %c0_2 = arith.constant 0 : index
    %2 = vector.load %arg2[%c0_1, %c0_2] : memref<128x128xbf16, #tpu.memory_space<vmem>>, vector<128x128xbf16>
    %cst = arith.constant dense<0.000000e+00> : vector<128x128xf32>
    %3 = tpu.matmul %1, %2, %cst {dimension_numbers = #tpu.dot_dimension_numbers<[1], [0], [0], [1], [0, 0, 1, 1], [], []>} : vector<128x128xbf16>, vector<128x128xbf16>, vector<128x128xf32> -> vector<128x128xf32>
    %c0_3 = arith.constant 0 : index
    %c0_4 = arith.constant 0 : index
    %4 = vector.load %arg3[%c0_3, %c0_4] : memref<1x128xf32, #tpu.memory_space<vmem>>, vector<1x128xf32>
    %5 = vector.broadcast %4 : vector<1x128xf32> to vector<128x128xf32>
    %6 = arith.addf %3, %5 : vector<128x128xf32>
    %7 = arith.negf %6 : vector<128x128xf32>
    %8 = math.exp %7 : vector<128x128xf32>
    %cst_5 = arith.constant 1.000000e+00 : f32
    %9 = vector.broadcast %cst_5 : f32 to vector<128x128xf32>
    %10 = arith.addf %9, %8 : vector<128x128xf32>
    %11 = arith.divf %9, %10 : vector<128x128xf32>
    %12 = arith.truncf %11 : vector<128x128xf32> to vector<128x128xbf16>
    %c0_6 = arith.constant 0 : index
    %c0_7 = arith.constant 0 : index
    %13 = vector.load %arg5[%c0_6, %c0_7] : memref<128x128xbf16, #tpu.memory_space<vmem>>, vector<128x128xbf16>
    tpu.vector_store %arg5[%c0_6, %c0_7], %12 {strides = array<i32>} : memref<128x128xbf16, #tpu.memory_space<vmem>>, vector<128x128xbf16>,
    %14 = arith.truncf %11 : vector<128x128xf32> to vector<128x128xbf16>
    %c0_8 = arith.constant 0 : index
    %c0_9 = arith.constant 0 : index
    %15 = vector.load %arg4[%c0_8, %c0_9] : memref<128x128xbf16, #tpu.memory_space<vmem>>, vector<128x128xbf16>
    %cst_10 = arith.constant dense<0.000000e+00> : vector<128x128xf32>
    %16 = tpu.matmul %14, %15, %cst_10 {dimension_numbers = #tpu.dot_dimension_numbers<[1], [0], [0], [1], [0, 0, 1, 1], [], []>} : vector<128x128xbf16>, vector<128x128xbf16>, vector<128x128xf32> -> vector<128x128xf32>
    %c0_11 = arith.constant 0 : index
    %c0_12 = arith.constant 0 : index
    %17 = vector.load %arg6[%c0_11, %c0_12] : memref<128x128xf32, #tpu.memory_space<vmem>>, vector<128x128xf32>
    tpu.vector_store %arg6[%c0_11, %c0_12], %16 {strides = array<i32>} : memref<128x128xf32, #tpu.memory_space<vmem>>, vector<128x128xf32>,
    return
  }
  func.func @transform_0(%arg0: i32) -> (i32, i32) {
    %c0_i32 = arith.constant 0 : i32
    %c0_i32_0 = arith.constant 0 : i32
    return %arg0, %c0_i32 : i32, i32
  }
  func.func @transform_1(%arg0: i32) -> (i32, i32) {
    %c0_i32 = arith.constant 0 : i32
    %c0_i32_0 = arith.constant 0 : i32
    %c0_i32_1 = arith.constant 0 : i32
    return %c0_i32, %c0_i32_0 : i32, i32
  }
  func.func @transform_2(%arg0: i32) -> (i32, i32) {
    %c0_i32 = arith.constant 0 : i32
    %c0_i32_0 = arith.constant 0 : i32
    %c0_i32_1 = arith.constant 0 : i32
    return %c0_i32, %c0_i32_0 : i32, i32
  }
  func.func @transform_3(%arg0: i32) -> (i32, i32) {
    %c0_i32 = arith.constant 0 : i32
    %c0_i32_0 = arith.constant 0 : i32
    %c0_i32_1 = arith.constant 0 : i32
    return %c0_i32, %c0_i32_0 : i32, i32
  }
  func.func @transform_4(%arg0: i32) -> (i32, i32) {
    %c0_i32 = arith.constant 0 : i32
    %c0_i32_0 = arith.constant 0 : i32
    return %arg0, %c0_i32 : i32, i32
  }
  func.func @transform_5(%arg0: i32) -> (i32, i32) {
    %c0_i32 = arith.constant 0 : i32
    %c0_i32_0 = arith.constant 0 : i32
    return %arg0, %c0_i32 : i32, i32
  }
}

</mosaic_0001>

<llo_original>
// kernel: tpu_custom_call.1
$region0: #{tpu_custom_call.1}
  #allocation0 [shape = 'u32[]', space=smem, size = 0x4, offset = 0x4, fixed_abs, tag = 'smem constant byte address 0x4 - core index']
  #allocation1 [shape = 'u32[144,128]{1,0:T(1,128)}', space=vmem, size = 0x12000, scoped, tag = 'internal scratch']
  %s0 = inlined_call_operand.hbm [shape: f32[256,128], index: 0, kind: input, shape index: {}]
  %s1 = inlined_call_operand.hbm [shape: bf16[128,128], index: 1, kind: input, shape index: {}]
  %s2 = inlined_call_operand.vmem [shape: f32[1,128], index: 2, kind: input, shape index: {}]
  %s3 = inlined_call_operand.hbm [shape: bf16[128,128], index: 3, kind: input, shape index: {}]
  %s4 = inlined_call_operand.hbm [shape: bf16[256,128], index: 4, kind: output, shape index: {0}]
  %s5 = inlined_call_operand.hbm [shape: f32[256,128], index: 5, kind: output, shape index: {1}]
  %6 = xla_tuple %s4, %s5
  %s7 = sld [smem:[#allocation0]]
  $region69: #{tpu_custom_call.1} parent=0
    _
  %s9 = ssub.s32 1, %s7
  %s10 = scalar_select 0, %s9, %s7
  $region1: #{tpu_custom_call.1} parent=0
    #allocation2 [shape = 'u8[131072]{0}', space=vmem, size = 0x20000, scoped, tag = 'input window, operand 0']
    #allocation3 [shape = 's32[2]{0}', space=sflag, size = 0x8, scoped, tag = 'scoped memory for tpu_custom_call.1']
    #allocation4 [shape = 's32[2]{0}', space=sflag, size = 0x8, scoped, tag = 'scoped memory for tpu_custom_call.1']
    #allocation5 [shape = 'u8[32768]{0}', space=vmem, size = 0x8000, scoped, tag = 'input window, operand 1, single buffered']
    #allocation6 [shape = 's32[1]{0}', space=sflag, size = 0x4, scoped, tag = 'scoped memory for tpu_custom_call.1']
    #allocation7 [shape = 'u8[32768]{0}', space=vmem, size = 0x8000, scoped, tag = 'input window, operand 3, single buffered']
    #allocation8 [shape = 'u8[65536]{0}', space=vmem, size = 0x10000, scoped, tag = 'output window, operand 0']
    #allocation9 [shape = 'u8[131072]{0}', space=vmem, size = 0x20000, scoped, tag = 'output window, operand 1']
    #allocation10 [shape = 's32[2]{0}', space=sflag, size = 0x8, scoped, tag = 'scoped memory for tpu_custom_call.1']
    %11 = vsyncpa [#allocation3], 0
    %s12 = scalar_lea.sflag [#allocation3], 1
    %13 = vsyncpa %s12, 0
    %14 = vsyncpa [#allocation6], 0
    %15 = vsyncpa [#allocation4], 0
    %s16 = scalar_lea.sflag [#allocation4], 1
    %17 = vsyncpa %s16, 0
    %18 = vsyncpa [#allocation10], 0
    %s19 = scalar_lea.sflag [#allocation10], 1
    %20 = vsyncpa %s19, 0
    loop: start=0, step=1, limit=4
    $region2: #{tpu_custom_call.1} parent=1 // loop_pre_header
      _
    $region3: #{tpu_custom_call.1} parent=1 // loop_header
      %s22 = sphi 0, %s26
      %p23 = scmp.ge.s32.totalorder %s22, 4
      %s32 = sphi 0, %s34
      %s35 = sphi 0, %s32
      %s36 = sphi 0, %s35
      %s52 = sphi 0, %s36
      %s56 = sphi 0, %s56
      %s58 = sphi 0, %s56
      %s59 = sphi 0, %s58
      %s73 = sphi 0, %s59
      %s77 = sphi 0, %s77
      %s79 = sphi 0, %s77
      %s80 = sphi 0, %s79
      %s94 = sphi 0, %s80
      %s98 = sphi 0, %s98
      %s100 = sphi 0, %s98
      %s101 = sphi 0, %s100
      %s115 = sphi 0, %s101
      %s121 = sphi 0, %s123
      %s124 = sphi 0, %s121
      %s125 = sphi 0, %s124
      %s141 = sphi 0, %s125
      %s147 = sphi 0, %s149
      %s150 = sphi 0, %s147
      %s151 = sphi 0, %s150
      %s167 = sphi 0, %s151
    $region4: #{tpu_custom_call.1} parent=1 // loop_header_branch
      %25 = sbr.rel (%p23) target = $region8
    $region5: #{tpu_custom_call.1} parent=1 // loop_body
      %s27 = ssub.s32 %s22, 1
      %s28 = ssub.s32 %s22, 2
      %s29 = sadd.s32 %s22, 1
      %s30 = ssub.s32 %s22, %s29
      %p31 = scmp.eq.s32.totalorder %s30, 0
      %s33 = sadd.s32 %s32, 1
      %s34 = scalar_select %p31, %s32, %s33
      %p37 = pneg %p31
      %p38 = scmp.eq.s32.totalorder %s22, 1
      %p39 = por %p37, %p38
      %p40 = scmp.ne.s32.totalorder %s32, %s35
      %p41 = scmp.eq.s32.totalorder %s22, 0
      %p42 = por %p40, %p41
      %p43 = scmp.ne.s32.totalorder %s32, %s35
      %p44 = scmp.eq.s32.totalorder %s27, 1
      %p45 = por %p43, %p44
      %p46 = scmp.ne.s32.totalorder %s35, %s36
      %p47 = scmp.eq.s32.totalorder %s27, 0
      %p48 = por %p46, %p47
      %p49 = scmp.ne.s32.totalorder %s35, %s36
      %p50 = scmp.eq.s32.totalorder %s28, 1
      %p51 = por %p49, %p50
      %p53 = scmp.ne.s32.totalorder %s36, %s52
      %p54 = scmp.eq.s32.totalorder %s28, 0
      %p55 = por %p53, %p54
      %s57 = sadd.s32 %s56, 1
      %p60 = scmp.eq.s32.totalorder %s22, 1
      %p61 = scmp.ne.s32.totalorder %s56, %s58
      %p62 = scmp.eq.s32.totalorder %s22, 0
      %p63 = por %p61, %p62
      %p64 = scmp.ne.s32.totalorder %s56, %s58
      %p65 = scmp.eq.s32.totalorder %s27, 1
      %p66 = por %p64, %p65
      %p67 = scmp.ne.s32.totalorder %s58, %s59
      %p68 = scmp.eq.s32.totalorder %s27, 0
      %p69 = por %p67, %p68
      %p70 = scmp.ne.s32.totalorder %s58, %s59
      %p71 = scmp.eq.s32.totalorder %s28, 1
      %p72 = por %p70, %p71
      %p74 = scmp.ne.s32.totalorder %s59, %s73
      %p75 = scmp.eq.s32.totalorder %s28, 0
      %p76 = por %p74, %p75
      %s78 = sadd.s32 %s77, 1
      %p81 = scmp.eq.s32.totalorder %s22, 1
      %p82 = scmp.ne.s32.totalorder %s77, %s79
      %p83 = scmp.eq.s32.totalorder %s22, 0
      %p84 = por %p82, %p83
      %p85 = scmp.ne.s32.totalorder %s77, %s79
      %p86 = scmp.eq.s32.totalorder %s27, 1
      %p87 = por %p85, %p86
      %p88 = scmp.ne.s32.totalorder %s79, %s80
      %p89 = scmp.eq.s32.totalorder %s27, 0
      %p90 = por %p88, %p89
      %p91 = scmp.ne.s32.totalorder %s79, %s80
      %p92 = scmp.eq.s32.totalorder %s28, 1
      %p93 = por %p91, %p92
      %p95 = scmp.ne.s32.totalorder %s80, %s94
      %p96 = scmp.eq.s32.totalorder %s28, 0
      %p97 = por %p95, %p96
      %s99 = sadd.s32 %s98, 1
      %p102 = scmp.eq.s32.totalorder %s22, 1
      %p103 = scmp.ne.s32.totalorder %s98, %s100
      %p104 = scmp.eq.s32.totalorder %s22, 0
      %p105 = por %p103, %p104
      %p106 = scmp.ne.s32.totalorder %s98, %s100
      %p107 = scmp.eq.s32.totalorder %s27, 1
      %p108 = por %p106, %p107
      %p109 = scmp.ne.s32.totalorder %s100, %s101
      %p110 = scmp.eq.s32.totalorder %s27, 0
      %p111 = por %p109, %p110
      %p112 = scmp.ne.s32.totalorder %s100, %s101
      %p113 = scmp.eq.s32.totalorder %s28, 1
      %p114 = por %p112, %p113
      %p116 = scmp.ne.s32.totalorder %s101, %s115
      %p117 = scmp.eq.s32.totalorder %s28, 0
      %p118 = por %p116, %p117
      %s119 = ssub.s32 %s22, %s29
      %p120 = scmp.eq.s32.totalorder %s119, 0
      %s122 = sadd.s32 %s121, 1
      %s123 = scalar_select %p120, %s121, %s122
      %p126 = pneg %p120
      %p127 = scmp.eq.s32.totalorder %s22, 1
      %p128 = por %p126, %p127
      %p129 = scmp.ne.s32.totalorder %s121, %s124
      %p130 = scmp.eq.s32.totalorder %s22, 0
      %p131 = por %p129, %p130
      %p132 = scmp.ne.s32.totalorder %s121, %s124
      %p133 = scmp.eq.s32.totalorder %s27, 1
      %p134 = por %p132, %p133
      %p135 = scmp.ne.s32.totalorder %s124, %s125
      %p136 = scmp.eq.s32.totalorder %s27, 0
      %p137 = por %p135, %p136
      %p138 = scmp.ne.s32.totalorder %s124, %s125
      %p139 = scmp.eq.s32.totalorder %s28, 1
      %p140 = por %p138, %p139
      %p142 = scmp.ne.s32.totalorder %s125, %s141
      %p143 = scmp.eq.s32.totalorder %s28, 0
      %p144 = por %p142, %p143
      %s145 = ssub.s32 %s22, %s29
      %p146 = scmp.eq.s32.totalorder %s145, 0
      %s148 = sadd.s32 %s147, 1
      %s149 = scalar_select %p146, %s147, %s148
      %p152 = pneg %p146
      %p153 = scmp.eq.s32.totalorder %s22, 1
      %p154 = por %p152, %p153
      %p155 = scmp.ne.s32.totalorder %s147, %s150
      %p156 = scmp.eq.s32.totalorder %s22, 0
      %p157 = por %p155, %p156
      %p158 = scmp.ne.s32.totalorder %s147, %s150
      %p159 = scmp.eq.s32.totalorder %s27, 1
      %p160 = por %p158, %p159
      %p161 = scmp.ne.s32.totalorder %s150, %s151
      %p162 = scmp.eq.s32.totalorder %s27, 0
      %p163 = por %p161, %p162
      %p164 = scmp.ne.s32.totalorder %s150, %s151
      %p165 = scmp.eq.s32.totalorder %s28, 1
      %p166 = por %p164, %p165
      %p168 = scmp.ne.s32.totalorder %s151, %s167
      %p169 = scmp.eq.s32.totalorder %s28, 0
      %p170 = por %p168, %p169
      %p171 = scmp.le.s32.totalorder 1, %s22
      %p172 = scmp.lt.s32.totalorder %s22, 3
      %p173 = pnand %p171, %p172
      %p174 = pneg %p173
      // Predicated region
      $region9: #{tpu_custom_call.1} parent=5 // pred_check
        _
      $region10: #{tpu_custom_call.1} parent=5 // pred_check_branch
        %176 = sbr.rel (%p173) target = $region12
      $region11: #{tpu_custom_call.1} parent=5 // pred_region
        %s177 = ssub.s32 %s22, 1
        // Predicated region
        $region13: #{tpu_custom_call.1} parent=11 // pred_check
          %p178 = pneg %p69
        $region14: #{tpu_custom_call.1} parent=11 // pred_check_branch
          %180 = sbr.rel (%p178) target = $region16
        $region15: #{tpu_custom_call.1} parent=11 // pred_region
          %s182 = ssub.s32 1024, 1024
          %183 = vsyncadd [#allocation6], %s182
          %s184 = sshll.u32 [#allocation5], 4
          %s185 = int_to_ptr.vmem [resolvable:$true] %s184
          %190 = dma.hbm_to_vmem [thread:$0]  %s1, 1024, %s185, [#allocation6], 64, 64, 4
        $region16: #{tpu_custom_call.1} parent=11 // pred_fallthru
          _
        // Predicated region
        $region17: #{tpu_custom_call.1} parent=11 // pred_check
          %p191 = pneg %p90
        $region18: #{tpu_custom_call.1} parent=11 // pred_check_branch
          %193 = sbr.rel (%p191) target = $region20
        $region19: #{tpu_custom_call.1} parent=11 // pred_region
          _
        $region20: #{tpu_custom_call.1} parent=11 // pred_fallthru
          _
        // Predicated region
        $region21: #{tpu_custom_call.1} parent=11 // pred_check
          %p194 = pneg %p111
        $region22: #{tpu_custom_call.1} parent=11 // pred_check_branch
          %196 = sbr.rel (%p194) target = $region24
        $region23: #{tpu_custom_call.1} parent=11 // pred_region
          %s198 = ssub.s32 1024, 1024
          %199 = vsyncadd [#allocation6], %s198
          %s200 = sshll.u32 [#allocation7], 4
          %s201 = int_to_ptr.vmem [resolvable:$true] %s200
          %206 = dma.hbm_to_vmem [thread:$0]  %s3, 1024, %s201, [#allocation6], 64, 64, 4
        $region24: #{tpu_custom_call.1} parent=11 // pred_fallthru
          _
      $region12: #{tpu_custom_call.1} parent=5 // pred_fallthru
        _
      %p207 = scmp.lt.s32.totalorder %s22, 2
      // Predicated region
      $region25: #{tpu_custom_call.1} parent=5 // pred_check
        %p208 = pneg %p207
      $region26: #{tpu_custom_call.1} parent=5 // pred_check_branch
        %210 = sbr.rel (%p208) target = $region28
      $region27: #{tpu_custom_call.1} parent=5 // pred_region
        // Predicated region
        $region29: #{tpu_custom_call.1} parent=27 // pred_check
          %p211 = pneg %p42
        $region30: #{tpu_custom_call.1} parent=27 // pred_check_branch
          %213 = sbr.rel (%p211) target = $region32
        $region31: #{tpu_custom_call.1} parent=27 // pred_region
          %s214 = sand.u32 %s32, 1
          %s215 = scalar_lea.sflag [#allocation3], %s214
          %s216 = sand.u32 %s32, 1
          %s217 = smul.addr %s216, 128
          %s218 = scalar_lea.vmem [#allocation2], %s217
          %s219 = smul.u32 16, %s22
          %s221 = ssub.s32 2048, 2048
          %222 = vsyncadd %s215, %s221
          %s223 = smul.addr %s219, 128
          %s224 = scalar_lea.hbm %s0, %s223
          %s225 = sshll.u32 %s218, 4
          %s226 = int_to_ptr.vmem [resolvable:$true] %s225
          %231 = dma.hbm_to_vmem [thread:$0]  %s224, 2048, %s226, %s215, 128, 128, 8
        $region32: #{tpu_custom_call.1} parent=27 // pred_fallthru
          _
      $region28: #{tpu_custom_call.1} parent=5 // pred_fallthru
        _
      %p232 = scmp.le.s32.totalorder 1, %s22
      %p233 = scmp.lt.s32.totalorder %s22, 3
      %p234 = pnand %p232, %p233
      %p235 = pneg %p234
      // Predicated region
      $region33: #{tpu_custom_call.1} parent=5 // pred_check
        _
      $region34: #{tpu_custom_call.1} parent=5 // pred_check_branch
        %237 = sbr.rel (%p234) target = $region36
      $region35: #{tpu_custom_call.1} parent=5 // pred_region
        %s238 = ssub.s32 %s22, 1
        %s239 = sand.u32 %s35, 1
        %s240 = scalar_lea.sflag [#allocation3], %s239
        %s241 = sand.u32 %s35, 1
        %s242 = smul.addr %s241, 128
        %s243 = scalar_lea.vmem [#allocation2], %s242
        // Predicated region
        $region37: #{tpu_custom_call.1} parent=35 // pred_check
          %p244 = pneg %p48
        $region38: #{tpu_custom_call.1} parent=35 // pred_check_branch
          %246 = sbr.rel (%p244) target = $region40
        $region39: #{tpu_custom_call.1} parent=35 // pred_region
          %247 = dma.done %s240, 2048
        $region40: #{tpu_custom_call.1} parent=35 // pred_fallthru
          _
        // Predicated region
        $region41: #{tpu_custom_call.1} parent=35 // pred_check
          %p248 = pneg %p69
        $region42: #{tpu_custom_call.1} parent=35 // pred_check_branch
          %250 = sbr.rel (%p248) target = $region44
        $region43: #{tpu_custom_call.1} parent=35 // pred_region
          %251 = dma.done [#allocation6], 1024
        $region44: #{tpu_custom_call.1} parent=35 // pred_fallthru
          _
        // Predicated region
        $region45: #{tpu_custom_call.1} parent=35 // pred_check
          %p252 = pneg %p111
        $region46: #{tpu_custom_call.1} parent=35 // pred_check_branch
          %254 = sbr.rel (%p252) target = $region48
        $region47: #{tpu_custom_call.1} parent=35 // pred_region
          %255 = dma.done [#allocation6], 1024
        $region48: #{tpu_custom_call.1} parent=35 // pred_fallthru
          _
        %s256 = sand.u32 %s35, 1
        %s257 = scalar_lea.sflag [#allocation3], %s256
        %s258 = sand.u32 %s35, 1
        %s259 = smul.addr %s258, 128
        %s260 = scalar_lea.vmem [#allocation2], %s259
        %p261 = pneg %p48
        %p262 = pneg %p45
        %p263 = pneg %p69
        %p264 = pneg %p66
        %p265 = pneg %p90
        %p266 = pneg %p87
        %p267 = pneg %p111
        %p268 = pneg %p108
        %p269 = pneg %p137
        %p270 = pneg %p134
        %s271 = sand.u32 %s124, 1
        %s272 = scalar_lea.sflag [#allocation4], %s271
        %s273 = sand.u32 %s124, 1
        %s274 = smul.addr %s273, 64
        %s275 = scalar_lea.vmem [#allocation8], %s274
        %p276 = pneg %p163
        %p277 = pneg %p160
        %s278 = sand.u32 %s150, 1
        %s279 = scalar_lea.sflag [#allocation10], %s278
        %s280 = sand.u32 %s150, 1
        %s281 = smul.addr %s280, 128
        %s282 = scalar_lea.vmem [#allocation9], %s281
        %s283 = smul.u32 16, %s27
        %s284 = smul.u32 16, %s27
        %s285 = smul.u32 16, %s27
        %v287 = vld [vmem:[%s243] sm:$0xff]
        %v288 = vld [vmem:[%s243 + $0x8] sm:$0xff]
        %v289 = vld [vmem:[%s243 + $0x10] sm:$0xff]
        %v290 = vld [vmem:[%s243 + $0x18] sm:$0xff]
        %v291 = vld [vmem:[%s243 + $0x20] sm:$0xff]
        %v292 = vld [vmem:[%s243 + $0x28] sm:$0xff]
        %v293 = vld [vmem:[%s243 + $0x30] sm:$0xff]
        %v294 = vld [vmem:[%s243 + $0x38] sm:$0xff]
        %v295 = vld [vmem:[%s243 + $0x40] sm:$0xff]
        %v296 = vld [vmem:[%s243 + $0x48] sm:$0xff]
        %v297 = vld [vmem:[%s243 + $0x50] sm:$0xff]
        %v298 = vld [vmem:[%s243 + $0x58] sm:$0xff]
        %v299 = vld [vmem:[%s243 + $0x60] sm:$0xff]
        %v300 = vld [vmem:[%s243 + $0x68] sm:$0xff]
        %v301 = vld [vmem:[%s243 + $0x70] sm:$0xff]
        %v302 = vld [vmem:[%s243 + $0x78] sm:$0xff]
        %v303 = vpack.c.bf16 %v288, %v287
        %v304 = vpack.c.bf16 %v290, %v289
        %v305 = vpack.c.bf16 %v292, %v291
        %v306 = vpack.c.bf16 %v294, %v293
        %v307 = vpack.c.bf16 %v296, %v295
        %v308 = vpack.c.bf16 %v298, %v297
        %v309 = vpack.c.bf16 %v300, %v299
        %v310 = vpack.c.bf16 %v302, %v301
        %v311 = vld [vmem:[#allocation5] sm:$0xf]
        %v312 = vld [vmem:[#allocation5 + $0x4] sm:$0xf]
        %v313 = vld [vmem:[#allocation5 + $0x8] sm:$0xf]
        %v314 = vld [vmem:[#allocation5 + $0xc] sm:$0xf]
        %v315 = vld [vmem:[#allocation5 + $0x10] sm:$0xf]
        %v316 = vld [vmem:[#allocation5 + $0x14] sm:$0xf]
        %v317 = vld [vmem:[#allocation5 + $0x18] sm:$0xf]
        %v318 = vld [vmem:[#allocation5 + $0x1c] sm:$0xf]
        %v319 = vld [vmem:[#allocation5 + $0x20] sm:$0xf]
        %v320 = vld [vmem:[#allocation5 + $0x24] sm:$0xf]
        %v321 = vld [vmem:[#allocation5 + $0x28] sm:$0xf]
        %v322 = vld [vmem:[#allocation5 + $0x2c] sm:$0xf]
        %v323 = vld [vmem:[#allocation5 + $0x30] sm:$0xf]
        %v324 = vld [vmem:[#allocation5 + $0x34] sm:$0xf]
        %v325 = vld [vmem:[#allocation5 + $0x38] sm:$0xf]
        %v326 = vld [vmem:[#allocation5 + $0x3c] sm:$0xf]
        %v327 = vld [vmem:[%s2] sm:$0x1]
        %v329 = vlaneseq
        %v330 = vshrl.u32 %v329, 7
        %v331 = vsub.s32 0, %v330
        %v332 = vrot.slane %v327, %v331
        %v350 = vunpack.c.l.b16 %v311
        %v351 = vunpack.c.l.b16 %v312
        %v352 = vunpack.c.l.b16 %v313
        %v353 = vunpack.c.l.b16 %v314
        %v354 = vunpack.c.l.b16 %v315
        %v355 = vunpack.c.l.b16 %v316
        %v356 = vunpack.c.l.b16 %v317
        %v357 = vunpack.c.l.b16 %v318
        %v358 = vunpack.c.l.b16 %v319
        %v359 = vunpack.c.l.b16 %v320
        %v360 = vunpack.c.l.b16 %v321
        %v361 = vunpack.c.l.b16 %v322
        %v362 = vunpack.c.l.b16 %v323
        %v363 = vunpack.c.l.b16 %v324
        %v364 = vunpack.c.l.b16 %v325
        %v365 = vunpack.c.l.b16 %v326
        %v366 = vpack.c.b16 %v351, %v350
        %v367 = vpack.c.b16 %v353, %v352
        %v368 = vpack.c.b16 %v355, %v354
        %v369 = vpack.c.b16 %v357, %v356
        %v370 = vpack.c.b16 %v359, %v358
        %v371 = vpack.c.b16 %v361, %v360
        %v372 = vpack.c.b16 %v363, %v362
        %v373 = vpack.c.b16 %v365, %v364
        %382 = vmatprep.subr.bf16.mxu0 0
        %383 = vmatpush1.bf16.msra.mxu0 %v373
        %384 = vmatprep.subr.bf16.mxu0 0
        %385 = vmatpush1.bf16.msra.mxu0 %v372
        %386 = vmatprep.subr.bf16.mxu0 0
        %387 = vmatpush1.bf16.msra.mxu0 %v371
        %388 = vmatprep.subr.bf16.mxu0 0
        %389 = vmatpush1.bf16.msra.mxu0 %v370
        %390 = vmatprep.subr.bf16.mxu0 0
        %391 = vmatpush1.bf16.msra.mxu0 %v369
        %392 = vmatprep.subr.bf16.mxu0 0
        %393 = vmatpush1.bf16.msra.mxu0 %v368
        %394 = vmatprep.subr.bf16.mxu0 0
        %395 = vmatpush1.bf16.msra.mxu0 %v367
        %396 = vmatprep.subr.bf16.mxu0 0
        %397 = vmatpush1.bf16.msra.mxu0 %v366
        %398 = vmatprep.subr.bf16.mxu0 0
        %399 = vmatpush2.bf16.msra.mxu0 0
        %400 = vmatprep.subr.bf16.mxu0 0
        %401 = vmatpush2.bf16.msra.mxu0 0
        %402 = vmatprep.subr.bf16.mxu0 0
        %403 = vmatpush2.bf16.msra.mxu0 0
        %404 = vmatprep.subr.bf16.mxu0 0
        %405 = vmatpush2.bf16.msra.mxu0 0
        %406 = vmatprep.subr.bf16.mxu0 0
        %407 = vmatpush2.bf16.msra.mxu0 0
        %408 = vmatprep.subr.bf16.mxu0 0
        %409 = vmatpush2.bf16.msra.mxu0 0
        %410 = vmatprep.subr.bf16.mxu0 0
        %411 = vmatpush2.bf16.msra.mxu0 0
        %412 = vmatprep.subr.bf16.mxu0 0
        %413 = vmatpush2.bf16.msra.mxu0 0
        %414 = vmatprep.mubr.bf16.mxu0 0
        %415 = vmatmul.mubr.bf16.gmra.mxu0 %v303
        %v416 = vpop.f32.mrf.mxu0
        %v417 = vadd.f32 %v332, %v416
        %v418 = vpop.f32.mrf.mxu0
        %v419 = vpop.f32.mrf.mxu0
        %v420 = vadd.f32 %v332, %v419
        %v421 = vpop.f32.mrf.mxu0
        %422 = vmatprep.mubr.bf16.mxu0 0
        %423 = vmatmul.mubr.bf16.gmra.mxu0 %v304
        %v424 = vpop.f32.mrf.mxu0
        %v425 = vadd.f32 %v332, %v424
        %v426 = vpop.f32.mrf.mxu0
        %v427 = vpop.f32.mrf.mxu0
        %v428 = vadd.f32 %v332, %v427
        %v429 = vpop.f32.mrf.mxu0
        %430 = vmatprep.mubr.bf16.mxu0 0
        %431 = vmatmul.mubr.bf16.gmra.mxu0 %v305
        %v432 = vpop.f32.mrf.mxu0
        %v433 = vadd.f32 %v332, %v432
        %v434 = vpop.f32.mrf.mxu0
        %v435 = vpop.f32.mrf.mxu0
        %v436 = vadd.f32 %v332, %v435
        %v437 = vpop.f32.mrf.mxu0
        %438 = vmatprep.mubr.bf16.mxu0 0
        %439 = vmatmul.mubr.bf16.gmra.mxu0 %v306
        %v440 = vpop.f32.mrf.mxu0
        %v441 = vadd.f32 %v332, %v440
        %v442 = vpop.f32.mrf.mxu0
        %v443 = vpop.f32.mrf.mxu0
        %v444 = vadd.f32 %v332, %v443
        %v445 = vpop.f32.mrf.mxu0
        %446 = vmatprep.mubr.bf16.mxu0 0
        %447 = vmatmul.mubr.bf16.gmra.mxu0 %v307
        %v448 = vpop.f32.mrf.mxu0
        %v449 = vadd.f32 %v332, %v448
        %v450 = vpop.f32.mrf.mxu0
        %v451 = vpop.f32.mrf.mxu0
        %v452 = vadd.f32 %v332, %v451
        %v453 = vpop.f32.mrf.mxu0
        %454 = vmatprep.mubr.bf16.mxu0 0
        %455 = vmatmul.mubr.bf16.gmra.mxu0 %v308
        %v456 = vpop.f32.mrf.mxu0
        %v457 = vadd.f32 %v332, %v456
        %v458 = vpop.f32.mrf.mxu0
        %v459 = vpop.f32.mrf.mxu0
        %v460 = vadd.f32 %v332, %v459
        %v461 = vpop.f32.mrf.mxu0
        %462 = vmatprep.mubr.bf16.mxu0 0
        %463 = vmatmul.mubr.bf16.gmra.mxu0 %v309
        %v464 = vpop.f32.mrf.mxu0
        %v465 = vadd.f32 %v332, %v464
        %v466 = vpop.f32.mrf.mxu0
        %v467 = vpop.f32.mrf.mxu0
        %v468 = vadd.f32 %v332, %v467
        %v469 = vpop.f32.mrf.mxu0
        %470 = vmatprep.mubr.bf16.mxu0 0
        %471 = vmatmul.mubr.bf16.gmra.mxu0 %v310
        %v472 = vpop.f32.mrf.mxu0
        %v473 = vadd.f32 %v332, %v472
        %v474 = vpop.f32.mrf.mxu0
        %v475 = vpop.f32.mrf.mxu0
        %v476 = vadd.f32 %v332, %v475
        %v477 = vpop.f32.mrf.mxu0
        %478 = vdwg.mxu0
        %v479 = vxor.u32 %v417, 2147483648
        %v480 = vxor.u32 %v420, 2147483648
        %v481 = vxor.u32 %v425, 2147483648
        %v482 = vxor.u32 %v428, 2147483648
        %v483 = vxor.u32 %v433, 2147483648
        %v484 = vxor.u32 %v436, 2147483648
        %v485 = vxor.u32 %v441, 2147483648
        %v486 = vxor.u32 %v444, 2147483648
        %v487 = vxor.u32 %v449, 2147483648
        %v488 = vxor.u32 %v452, 2147483648
        %v489 = vxor.u32 %v457, 2147483648
        %v490 = vxor.u32 %v460, 2147483648
        %v491 = vxor.u32 %v465, 2147483648
        %v492 = vxor.u32 %v468, 2147483648
        %v493 = vxor.u32 %v473, 2147483648
        %v494 = vxor.u32 %v476, 2147483648
        %v495 = vmul.f32 %v479, 1.442695
        %v496 = vpow.pop %v495
        %v497 = vmul.f32 %v480, 1.442695
        %v498 = vpow.pop %v497
        %v499 = vmul.f32 %v481, 1.442695
        %v500 = vpow.pop %v499
        %v501 = vmul.f32 %v482, 1.442695
        %v502 = vpow.pop %v501
        %v503 = vmul.f32 %v483, 1.442695
        %v504 = vpow.pop %v503
        %v505 = vmul.f32 %v484, 1.442695
        %v506 = vpow.pop %v505
        %v507 = vmul.f32 %v485, 1.442695
        %v508 = vpow.pop %v507
        %v509 = vmul.f32 %v486, 1.442695
        %v510 = vpow.pop %v509
        %v511 = vmul.f32 %v487, 1.442695
        %v512 = vpow.pop %v511
        %v513 = vmul.f32 %v488, 1.442695
        %v514 = vpow.pop %v513
        %v515 = vmul.f32 %v489, 1.442695
        %v516 = vpow.pop %v515
        %v517 = vmul.f32 %v490, 1.442695
        %v518 = vpow.pop %v517
        %v519 = vmul.f32 %v491, 1.442695
        %v520 = vpow.pop %v519
        %v521 = vmul.f32 %v492, 1.442695
        %v522 = vpow.pop %v521
        %v523 = vmul.f32 %v493, 1.442695
        %v524 = vpow.pop %v523
        %v525 = vmul.f32 %v494, 1.442695
        %v526 = vpow.pop %v525
        %v527 = vadd.f32 %v496, 1.0
        %v528 = vadd.f32 %v498, 1.0
        %v529 = vadd.f32 %v500, 1.0
        %v530 = vadd.f32 %v502, 1.0
        %v531 = vadd.f32 %v504, 1.0
        %v532 = vadd.f32 %v506, 1.0
        %v533 = vadd.f32 %v508, 1.0
        %v534 = vadd.f32 %v510, 1.0
        %v535 = vadd.f32 %v512, 1.0
        %v536 = vadd.f32 %v514, 1.0
        %v537 = vadd.f32 %v516, 1.0
        %v538 = vadd.f32 %v518, 1.0
        %v539 = vadd.f32 %v520, 1.0
        %v540 = vadd.f32 %v522, 1.0
        %v541 = vadd.f32 %v524, 1.0
        %v542 = vadd.f32 %v526, 1.0
        %v543 = vrcp.pop %v527
        %v544 = vmul.f32 1.0, %v543
        %v545 = vrcp.pop %v528
        %v546 = vmul.f32 1.0, %v545
        %v547 = vrcp.pop %v529
        %v548 = vmul.f32 1.0, %v547
        %v549 = vrcp.pop %v530
        %v550 = vmul.f32 1.0, %v549
        %v551 = vrcp.pop %v531
        %v552 = vmul.f32 1.0, %v551
        %v553 = vrcp.pop %v532
        %v554 = vmul.f32 1.0, %v553
        %v555 = vrcp.pop %v533
        %v556 = vmul.f32 1.0, %v555
        %v557 = vrcp.pop %v534
        %v558 = vmul.f32 1.0, %v557
        %v559 = vrcp.pop %v535
        %v560 = vmul.f32 1.0, %v559
        %v561 = vrcp.pop %v536
        %v562 = vmul.f32 1.0, %v561
        %v563 = vrcp.pop %v537
        %v564 = vmul.f32 1.0, %v563
        %v565 = vrcp.pop %v538
        %v566 = vmul.f32 1.0, %v565
        %v567 = vrcp.pop %v539
        %v568 = vmul.f32 1.0, %v567
        %v569 = vrcp.pop %v540
        %v570 = vmul.f32 1.0, %v569
        %v571 = vrcp.pop %v541
        %v572 = vmul.f32 1.0, %v571
        %v573 = vrcp.pop %v542
        %v574 = vmul.f32 1.0, %v573
        %v575 = vpack.c.bf16 %v546, %v544
        %v576 = vpack.c.bf16 %v550, %v548
        %v577 = vpack.c.bf16 %v554, %v552
        %v578 = vpack.c.bf16 %v558, %v556
        %v579 = vpack.c.bf16 %v562, %v560
        %v580 = vpack.c.bf16 %v566, %v564
        %v581 = vpack.c.bf16 %v570, %v568
        %v582 = vpack.c.bf16 %v574, %v572
        %v591 = vunpack.c.l.b16 %v575
        %v592 = vunpack.c.h.b16 %v575
        %v593 = vunpack.c.l.b16 %v576
        %v594 = vunpack.c.h.b16 %v576
        %v595 = vunpack.c.l.b16 %v577
        %v596 = vunpack.c.h.b16 %v577
        %v597 = vunpack.c.l.b16 %v578
        %v598 = vunpack.c.h.b16 %v578
        %v599 = vunpack.c.l.b16 %v579
        %v600 = vunpack.c.h.b16 %v579
        %v601 = vunpack.c.l.b16 %v580
        %v602 = vunpack.c.h.b16 %v580
        %v603 = vunpack.c.l.b16 %v581
        %v604 = vunpack.c.h.b16 %v581
        %v605 = vunpack.c.l.b16 %v582
        %v606 = vunpack.c.h.b16 %v582
        %v607 = vpack.c.b16 %v591, %v591
        %v608 = vpack.c.b16 %v592, %v592
        %v609 = vpack.c.b16 %v593, %v593
        %v610 = vpack.c.b16 %v594, %v594
        %v611 = vpack.c.b16 %v595, %v595
        %v612 = vpack.c.b16 %v596, %v596
        %v613 = vpack.c.b16 %v597, %v597
        %v614 = vpack.c.b16 %v598, %v598
        %v615 = vpack.c.b16 %v599, %v599
        %v616 = vpack.c.b16 %v600, %v600
        %v617 = vpack.c.b16 %v601, %v601
        %v618 = vpack.c.b16 %v602, %v602
        %v619 = vpack.c.b16 %v603, %v603
        %v620 = vpack.c.b16 %v604, %v604
        %v621 = vpack.c.b16 %v605, %v605
        %v622 = vpack.c.b16 %v606, %v606
        %639 = vst [vmem:[%s275] sm:$0xf] %v607
        %640 = vst [vmem:[%s275 + $0x4] sm:$0xf] %v608
        %641 = vst [vmem:[%s275 + $0x8] sm:$0xf] %v609
        %642 = vst [vmem:[%s275 + $0xc] sm:$0xf] %v610
        %643 = vst [vmem:[%s275 + $0x10] sm:$0xf] %v611
        %644 = vst [vmem:[%s275 + $0x14] sm:$0xf] %v612
        %645 = vst [vmem:[%s275 + $0x18] sm:$0xf] %v613
        %646 = vst [vmem:[%s275 + $0x1c] sm:$0xf] %v614
        %647 = vst [vmem:[%s275 + $0x20] sm:$0xf] %v615
        %648 = vst [vmem:[%s275 + $0x24] sm:$0xf] %v616
        %649 = vst [vmem:[%s275 + $0x28] sm:$0xf] %v617
        %650 = vst [vmem:[%s275 + $0x2c] sm:$0xf] %v618
        %651 = vst [vmem:[%s275 + $0x30] sm:$0xf] %v619
        %652 = vst [vmem:[%s275 + $0x34] sm:$0xf] %v620
        %653 = vst [vmem:[%s275 + $0x38] sm:$0xf] %v621
        %654 = vst [vmem:[%s275 + $0x3c] sm:$0xf] %v622
        %v655 = vld [vmem:[#allocation7] sm:$0xf]
        %v656 = vld [vmem:[#allocation7 + $0x4] sm:$0xf]
        %v657 = vld [vmem:[#allocation7 + $0x8] sm:$0xf]
        %v658 = vld [vmem:[#allocation7 + $0xc] sm:$0xf]
        %v659 = vld [vmem:[#allocation7 + $0x10] sm:$0xf]
        %v660 = vld [vmem:[#allocation7 + $0x14] sm:$0xf]
        %v661 = vld [vmem:[#allocation7 + $0x18] sm:$0xf]
        %v662 = vld [vmem:[#allocation7 + $0x1c] sm:$0xf]
        %v663 = vld [vmem:[#allocation7 + $0x20] sm:$0xf]
        %v664 = vld [vmem:[#allocation7 + $0x24] sm:$0xf]
        %v665 = vld [vmem:[#allocation7 + $0x28] sm:$0xf]
        %v666 = vld [vmem:[#allocation7 + $0x2c] sm:$0xf]
        %v667 = vld [vmem:[#allocation7 + $0x30] sm:$0xf]
        %v668 = vld [vmem:[#allocation7 + $0x34] sm:$0xf]
        %v669 = vld [vmem:[#allocation7 + $0x38] sm:$0xf]
        %v670 = vld [vmem:[#allocation7 + $0x3c] sm:$0xf]
        %v687 = vunpack.c.l.b16 %v655
        %v688 = vunpack.c.l.b16 %v656
        %v689 = vunpack.c.l.b16 %v657
        %v690 = vunpack.c.l.b16 %v658
        %v691 = vunpack.c.l.b16 %v659
        %v692 = vunpack.c.l.b16 %v660
        %v693 = vunpack.c.l.b16 %v661
        %v694 = vunpack.c.l.b16 %v662
        %v695 = vunpack.c.l.b16 %v663
        %v696 = vunpack.c.l.b16 %v664
        %v697 = vunpack.c.l.b16 %v665
        %v698 = vunpack.c.l.b16 %v666
        %v699 = vunpack.c.l.b16 %v667
        %v700 = vunpack.c.l.b16 %v668
        %v701 = vunpack.c.l.b16 %v669
        %v702 = vunpack.c.l.b16 %v670
        %v703 = vpack.c.b16 %v688, %v687
        %v704 = vpack.c.b16 %v690, %v689
        %v705 = vpack.c.b16 %v692, %v691
        %v706 = vpack.c.b16 %v694, %v693
        %v707 = vpack.c.b16 %v696, %v695
        %v708 = vpack.c.b16 %v698, %v697
        %v709 = vpack.c.b16 %v700, %v699
        %v710 = vpack.c.b16 %v702, %v701
        %719 = vmatprep.subr.bf16.mxu0 0
        %720 = vmatpush1.bf16.msra.mxu0 %v710
        %721 = vmatprep.subr.bf16.mxu0 0
        %722 = vmatpush1.bf16.msra.mxu0 %v709
        %723 = vmatprep.subr.bf16.mxu0 0
        %724 = vmatpush1.bf16.msra.mxu0 %v708
        %725 = vmatprep.subr.bf16.mxu0 0
        %726 = vmatpush1.bf16.msra.mxu0 %v707
        %727 = vmatprep.subr.bf16.mxu0 0
        %728 = vmatpush1.bf16.msra.mxu0 %v706
        %729 = vmatprep.subr.bf16.mxu0 0
        %730 = vmatpush1.bf16.msra.mxu0 %v705
        %731 = vmatprep.subr.bf16.mxu0 0
        %732 = vmatpush1.bf16.msra.mxu0 %v704
        %733 = vmatprep.subr.bf16.mxu0 0
        %734 = vmatpush1.bf16.msra.mxu0 %v703
        %735 = vmatprep.subr.bf16.mxu0 0
        %736 = vmatpush2.bf16.msra.mxu0 0
        %737 = vmatprep.subr.bf16.mxu0 0
        %738 = vmatpush2.bf16.msra.mxu0 0
        %739 = vmatprep.subr.bf16.mxu0 0
        %740 = vmatpush2.bf16.msra.mxu0 0
        %741 = vmatprep.subr.bf16.mxu0 0
        %742 = vmatpush2.bf16.msra.mxu0 0
        %743 = vmatprep.subr.bf16.mxu0 0
        %744 = vmatpush2.bf16.msra.mxu0 0
        %745 = vmatprep.subr.bf16.mxu0 0
        %746 = vmatpush2.bf16.msra.mxu0 0
        %747 = vmatprep.subr.bf16.mxu0 0
        %748 = vmatpush2.bf16.msra.mxu0 0
        %749 = vmatprep.subr.bf16.mxu0 0
        %750 = vmatpush2.bf16.msra.mxu0 0
        %751 = vmatprep.mubr.bf16.mxu0 0
        %752 = vmatmul.mubr.bf16.gmra.mxu0 %v575
        %v753 = vpop.f32.mrf.mxu0
        %v754 = vadd.f32 0.0, %v753
        %v755 = vpop.f32.mrf.mxu0
        %v756 = vpop.f32.mrf.mxu0
        %v757 = vadd.f32 0.0, %v756
        %v758 = vpop.f32.mrf.mxu0
        %759 = vmatprep.mubr.bf16.mxu0 0
        %760 = vmatmul.mubr.bf16.gmra.mxu0 %v576
        %v761 = vpop.f32.mrf.mxu0
        %v762 = vadd.f32 0.0, %v761
        %v763 = vpop.f32.mrf.mxu0
        %v764 = vpop.f32.mrf.mxu0
        %v765 = vadd.f32 0.0, %v764
        %v766 = vpop.f32.mrf.mxu0
        %767 = vmatprep.mubr.bf16.mxu0 0
        %768 = vmatmul.mubr.bf16.gmra.mxu0 %v577
        %v769 = vpop.f32.mrf.mxu0
        %v770 = vadd.f32 0.0, %v769
        %v771 = vpop.f32.mrf.mxu0
        %v772 = vpop.f32.mrf.mxu0
        %v773 = vadd.f32 0.0, %v772
        %v774 = vpop.f32.mrf.mxu0
        %775 = vmatprep.mubr.bf16.mxu0 0
        %776 = vmatmul.mubr.bf16.gmra.mxu0 %v578
        %v777 = vpop.f32.mrf.mxu0
        %v778 = vadd.f32 0.0, %v777
        %v779 = vpop.f32.mrf.mxu0
        %v780 = vpop.f32.mrf.mxu0
        %v781 = vadd.f32 0.0, %v780
        %v782 = vpop.f32.mrf.mxu0
        %783 = vmatprep.mubr.bf16.mxu0 0
        %784 = vmatmul.mubr.bf16.gmra.mxu0 %v579
        %v785 = vpop.f32.mrf.mxu0
        %v786 = vadd.f32 0.0, %v785
        %v787 = vpop.f32.mrf.mxu0
        %v788 = vpop.f32.mrf.mxu0
        %v789 = vadd.f32 0.0, %v788
        %v790 = vpop.f32.mrf.mxu0
        %791 = vmatprep.mubr.bf16.mxu0 0
        %792 = vmatmul.mubr.bf16.gmra.mxu0 %v580
        %v793 = vpop.f32.mrf.mxu0
        %v794 = vadd.f32 0.0, %v793
        %v795 = vpop.f32.mrf.mxu0
        %v796 = vpop.f32.mrf.mxu0
        %v797 = vadd.f32 0.0, %v796
        %v798 = vpop.f32.mrf.mxu0
        %799 = vmatprep.mubr.bf16.mxu0 0
        %800 = vmatmul.mubr.bf16.gmra.mxu0 %v581
        %v801 = vpop.f32.mrf.mxu0
        %v802 = vadd.f32 0.0, %v801
        %v803 = vpop.f32.mrf.mxu0
        %v804 = vpop.f32.mrf.mxu0
        %v805 = vadd.f32 0.0, %v804
        %v806 = vpop.f32.mrf.mxu0
        %807 = vmatprep.mubr.bf16.mxu0 0
        %808 = vmatmul.mubr.bf16.gmra.mxu0 %v582
        %v809 = vpop.f32.mrf.mxu0
        %v810 = vadd.f32 0.0, %v809
        %v811 = vpop.f32.mrf.mxu0
        %v812 = vpop.f32.mrf.mxu0
        %v813 = vadd.f32 0.0, %v812
        %v814 = vpop.f32.mrf.mxu0
        %815 = vdwg.mxu0
        %816 = vst [vmem:[%s282] sm:$0xff] %v754
        %817 = vst [vmem:[%s282 + $0x8] sm:$0xff] %v757
        %818 = vst [vmem:[%s282 + $0x10] sm:$0xff] %v762
        %819 = vst [vmem:[%s282 + $0x18] sm:$0xff] %v765
        %820 = vst [vmem:[%s282 + $0x20] sm:$0xff] %v770
        %821 = vst [vmem:[%s282 + $0x28] sm:$0xff] %v773
        %822 = vst [vmem:[%s282 + $0x30] sm:$0xff] %v778
        %823 = vst [vmem:[%s282 + $0x38] sm:$0xff] %v781
        %824 = vst [vmem:[%s282 + $0x40] sm:$0xff] %v786
        %825 = vst [vmem:[%s282 + $0x48] sm:$0xff] %v789
        %826 = vst [vmem:[%s282 + $0x50] sm:$0xff] %v794
        %827 = vst [vmem:[%s282 + $0x58] sm:$0xff] %v797
        %828 = vst [vmem:[%s282 + $0x60] sm:$0xff] %v802
        %829 = vst [vmem:[%s282 + $0x68] sm:$0xff] %v805
        %830 = vst [vmem:[%s282 + $0x70] sm:$0xff] %v810
        %831 = vst [vmem:[%s282 + $0x78] sm:$0xff] %v813
        %s832 = sand.u32 %s124, 1
        %s833 = scalar_lea.sflag [#allocation4], %s832
        %s834 = sand.u32 %s124, 1
        %s835 = smul.addr %s834, 64
        %s836 = scalar_lea.vmem [#allocation8], %s835
        %s837 = sand.u32 %s150, 1
        %s838 = scalar_lea.sflag [#allocation10], %s837
        %s839 = sand.u32 %s150, 1
        %s840 = smul.addr %s839, 128
        %s841 = scalar_lea.vmem [#allocation9], %s840
        // Predicated region
        $region49: #{tpu_custom_call.1} parent=35 // pred_check
          %p842 = pneg %p134
        $region50: #{tpu_custom_call.1} parent=35 // pred_check_branch
          %844 = sbr.rel (%p842) target = $region52
        $region51: #{tpu_custom_call.1} parent=35 // pred_region
          %s845 = smul.u32 16, %s27
          %s847 = ssub.s32 1024, 1024
          %848 = vsyncadd %s833, %s847
          %s849 = smul.addr %s845, 64
          %s850 = scalar_lea.hbm %s4, %s849
          %s851 = sshll.u32 %s836, 4
          %s852 = int_to_ptr.vmem [resolvable:$true] %s851
          %857 = dma.vmem_to_hbm [thread:$0]  %s852, 1024, %s850, %s833, 64, 64, 4
        $region52: #{tpu_custom_call.1} parent=35 // pred_fallthru
          _
        // Predicated region
        $region53: #{tpu_custom_call.1} parent=35 // pred_check
          %p858 = pneg %p160
        $region54: #{tpu_custom_call.1} parent=35 // pred_check_branch
          %860 = sbr.rel (%p858) target = $region56
        $region55: #{tpu_custom_call.1} parent=35 // pred_region
          %s861 = smul.u32 16, %s27
          %s863 = ssub.s32 2048, 2048
          %864 = vsyncadd %s838, %s863
          %s865 = smul.addr %s861, 128
          %s866 = scalar_lea.hbm %s5, %s865
          %s867 = sshll.u32 %s841, 4
          %s868 = int_to_ptr.vmem [resolvable:$true] %s867
          %873 = dma.vmem_to_hbm [thread:$0]  %s868, 2048, %s866, %s838, 128, 128, 8
        $region56: #{tpu_custom_call.1} parent=35 // pred_fallthru
          _
      $region36: #{tpu_custom_call.1} parent=5 // pred_fallthru
        _
      %p874 = scmp.le.s32.totalorder 2, %s22
      // Predicated region
      $region57: #{tpu_custom_call.1} parent=5 // pred_check
        %p875 = pneg %p874
      $region58: #{tpu_custom_call.1} parent=5 // pred_check_branch
        %877 = sbr.rel (%p875) target = $region60
      $region59: #{tpu_custom_call.1} parent=5 // pred_region
        %s878 = ssub.s32 %s22, 2
        // Predicated region
        $region61: #{tpu_custom_call.1} parent=59 // pred_check
          %p879 = pneg %p140
        $region62: #{tpu_custom_call.1} parent=59 // pred_check_branch
          %881 = sbr.rel (%p879) target = $region64
        $region63: #{tpu_custom_call.1} parent=59 // pred_region
          %s882 = sand.u32 %s125, 1
          %s883 = scalar_lea.sflag [#allocation4], %s882
          %s884 = sand.u32 %s125, 1
          %s885 = smul.addr %s884, 64
          %s886 = scalar_lea.vmem [#allocation8], %s885
          %887 = dma.done %s883, 1024
        $region64: #{tpu_custom_call.1} parent=59 // pred_fallthru
          _
        // Predicated region
        $region65: #{tpu_custom_call.1} parent=59 // pred_check
          %p888 = pneg %p166
        $region66: #{tpu_custom_call.1} parent=59 // pred_check_branch
          %890 = sbr.rel (%p888) target = $region68
        $region67: #{tpu_custom_call.1} parent=59 // pred_region
          %s891 = sand.u32 %s151, 1
          %s892 = scalar_lea.sflag [#allocation10], %s891
          %s893 = sand.u32 %s151, 1
          %s894 = smul.addr %s893, 128
          %s895 = scalar_lea.vmem [#allocation9], %s894
          %896 = dma.done %s892, 2048
        $region68: #{tpu_custom_call.1} parent=59 // pred_fallthru
          _
      $region60: #{tpu_custom_call.1} parent=5 // pred_fallthru
        _
    $region6: #{tpu_custom_call.1} parent=1 // loop_footer
      %s26 = sadd.s32 1, %s22
    $region7: #{tpu_custom_call.1} parent=1 // loop_footer_branch
      %21 = sbr.rel target = $region3
    $region8: #{tpu_custom_call.1} parent=1 // loop_exit
      _
    %897 = vsyncpa [#allocation3], 1
    %s898 = scalar_lea.sflag [#allocation3], 1
    %899 = vsyncpa %s898, 1
    %900 = vsyncpa [#allocation6], 1
    %901 = vsyncpa [#allocation4], 1
    %s902 = scalar_lea.sflag [#allocation4], 1
    %903 = vsyncpa %s902, 1
    %904 = vsyncpa [#allocation10], 1
    %s905 = scalar_lea.sflag [#allocation10], 1
    %906 = vsyncpa %s905, 1

</llo_original>
